<compile_context>
chip_gen: v7x
topology: tpu7x:2x2x1
jax: 0.10.0
libtpu: 0.0.40
codegen_flags: <defaults>
</compile_context>

<pallas_src>
import functools

import jax
import jax.numpy as jnp
from jax.experimental import pallas as pl
from jax.experimental.pallas import tpu as pltpu

_LANES = 128
_SUB = 8


def _region_loss_kernel(alpha_ref, y_ref, num_out, den_out, num_acc, den_acc,
                        *, a_coef, b_coef, soft, needs_mask, total_hw,
                        n_dim, c_dim, rows_per_block, acc_rows, inner_blocks,
                        nblocks_total):
    """Grid = (split, spatial-block).  Accumulators live across the inner axis."""
    t = pl.program_id(1)

    @pl.when(t == 0)
    def _init():
        num_acc[...] = jnp.zeros_like(num_acc)
        den_acc[...] = jnp.zeros_like(den_acc)

    alpha = alpha_ref[...].astype(jnp.float32)      # (N, C, rows, 128)
    y = y_ref[...].astype(jnp.float32)

    # S = alpha.sum(dim=1, keepdim=True): reduce over the C axis (VPU adds).
    S = jnp.sum(alpha, axis=1, keepdims=True)       # (N, 1, rows, 128)
    # EUP reciprocal (approx) + one Newton-Raphson refinement -> ~1e-6 rel err.
    inv_s = pl.reciprocal(S, approx=True)
    inv_s = inv_s * (2.0 - S * inv_s)
    p = alpha * inv_s                               # expected probabilities

    num_c = y * p
    if soft:
        # alpha*(S-alpha)/(S*S*(S+1)) == p*(1-p)/(S+1)
        s1 = S + 1.0
        inv_s1 = pl.reciprocal(s1, approx=True)
        inv_s1 = inv_s1 * (2.0 - s1 * inv_s1)
        den_a = p * p + p * (1.0 - p) * inv_s1
        den_b = y * y
    else:
        den_a = p
        den_b = y
    den_c = a_coef * den_a + b_coef * den_b

    def _accumulate(nv, dv):
        # Tree-reduce the sublane-group axis into the small (N, C, acc_rows, 128)
        # accumulators: pure VALU adds (vreg-aligned reshape, no XLU), so the
        # hot loop only touches the tiny scratch instead of a full block.
        if acc_rows != rows_per_block:
            g = rows_per_block // acc_rows
            nv = jnp.sum(nv.reshape(n_dim, c_dim, g, acc_rows, _LANES), axis=2)
            dv = jnp.sum(dv.reshape(n_dim, c_dim, g, acc_rows, _LANES), axis=2)
        num_acc[...] += nv
        den_acc[...] += dv

    if needs_mask:
        # Only the final global block contains padded pixels -> gate all the
        # iota / compare / select work off the steady-state loop.
        last = nblocks_total - 1
        blk = pl.program_id(0) * inner_blocks + t

        @pl.when(blk != last)
        def _acc_fast():
            _accumulate(num_c, den_c)

        @pl.when(blk == last)
        def _acc_masked():
            rows = jax.lax.broadcasted_iota(jnp.int32, num_c.shape, 2)
            lanes = jax.lax.broadcasted_iota(jnp.int32, num_c.shape, 3)
            flat = (last * rows_per_block + rows) * _LANES + lanes
            valid = flat < total_hw
            _accumulate(jnp.where(valid, num_c, 0.0),
                        jnp.where(valid, den_c, 0.0))
    else:
        _accumulate(num_c, den_c)

    @pl.when(t == pl.num_programs(1) - 1)
    def _finalize():
        num_out[...] = jnp.sum(jnp.sum(num_acc[...], axis=3), axis=2)   # (N, C)
        den_out[...] = jnp.sum(jnp.sum(den_acc[...], axis=3), axis=2)   # (N, C)


def _vmem_capacity_bytes():
    """Physical VMEM per core; conservative 64 MiB (v7x) fallback."""
    try:
        info = pltpu.get_tpu_info()
        cap = int(getattr(info, "vmem_capacity_bytes", 0))
        if cap > 0:
            return cap
    except Exception:
        pass
    return 64 * 1024 * 1024


def _num_tensorcores():
    """TensorCores per chip: 2 on v7x-class, 1 on v5e/v6e; safe fallback 1."""
    try:
        dev = jax.devices()[0]
        if getattr(dev, "platform", "") != "tpu":
            return 1
        kind = str(getattr(dev, "device_kind", "")).lower()
        return 2 if "v7" in kind else 1
    except Exception:
        return 1


def region_loss(alpha, y, *, alpha_coef=0.5, gamma=1, soft=False, smooth=1e-5):
    """Pallas implementation of RegionLoss.forward(alpha, y) -> scalar."""
    assert alpha.shape == y.shape
    N, C = int(alpha.shape[0]), int(alpha.shape[1])
    HW = 1
    for d in alpha.shape[2:]:
        HW *= int(d)
    HW = max(HW, 1)

    r128 = -(-HW // _LANES)                        # rows after 128-alignment

    # ---- generation-aware VMEM budget (4 input block slots only) ----------
    vmem_phys = max(_vmem_capacity_bytes(), 32 * 1024 * 1024)
    block_budget = min(24 * 1024 * 1024, int(vmem_phys * 0.4))
    row_bytes = N * C * _LANES * (alpha.dtype.itemsize + y.dtype.itemsize)
    rows_cap = block_budget // (2 * row_bytes)     # x2 pipeline buffers
    rows_cap = max(_SUB, min(512, (rows_cap // _SUB) * _SUB))

    # ---- choose block rows; prefer an exact tiling of r128 (no jnp.pad) ----
    if r128 <= rows_cap:
        rows_per_block, nblocks = r128, 1          # full-dim block, always legal
    else:
        rows_per_block = 0
        if r128 % _SUB == 0:
            lo = max(_SUB, (rows_cap // 2) // _SUB * _SUB)
            for rows in range(rows_cap, lo - 1, -_SUB):
                if r128 % rows == 0:
                    rows_per_block = rows          # exact coverage, zero pad
                    break
        if rows_per_block == 0:
            rows_per_block = rows_cap              # falls back to padded coverage
        nblocks = -(-r128 // rows_per_block)

    # Two-TC split only where it exists (v7x); on 1-TC chips it is pure overhead.
    n_tc = _num_tensorcores()
    nsplit = 2 if (n_tc >= 2 and nblocks >= 2 and nblocks % 2 == 0) else 1
    inner_blocks = nblocks // nsplit

    coverage = nblocks * rows_per_block * _LANES
    pad = coverage - HW

    a3 = jnp.reshape(alpha, (N, C, HW))
    y3 = jnp.reshape(y, (N, C, HW))
    if pad:
        # TODO(synk): this jnp.pad costs one extra HBM pass over alpha/y; the
        # block-row selection above makes it trigger only when HW is not a
        # multiple of 128 (or has awkward factors).
        a3 = jnp.pad(a3, ((0, 0), (0, 0), (0, pad)), constant_values=1.0)
        y3 = jnp.pad(y3, ((0, 0), (0, 0), (0, pad)), constant_values=0.0)
    a4 = jnp.reshape(a3, (N, C, nblocks * rows_per_block, _LANES))
    y4 = jnp.reshape(y3, (N, C, nblocks * rows_per_block, _LANES))

    # Small accumulators: 8 sublane rows when the block tree-reduces cleanly;
    # otherwise (single small block only) keep the block's own row count.
    acc_rows = _SUB if rows_per_block % _SUB == 0 else rows_per_block

    kernel = functools.partial(
        _region_loss_kernel,
        a_coef=float(alpha_coef),
        b_coef=float(1.0 - alpha_coef),
        soft=bool(soft),
        needs_mask=bool(pad > 0),
        total_hw=int(HW),
        n_dim=N, c_dim=C,
        rows_per_block=int(rows_per_block),
        acc_rows=int(acc_rows),
        inner_blocks=int(inner_blocks),
        nblocks_total=int(nblocks),
    )

    in_map = lambda sp, t: (0, 0, sp * inner_blocks + t, 0)
    out_map = lambda sp, t: (sp, 0, 0)

    if nsplit > 1:
        dim_sems = (getattr(pltpu, "CORE_PARALLEL", "parallel"),
                    getattr(pltpu, "ARBITRARY", "arbitrary"))
    else:
        dim_sems = ("arbitrary", "arbitrary")

    vmem_limit = int(min(vmem_phys * 3 // 4,
                         max(32 * 1024 * 1024,
                             2 * block_budget + 4 * 1024 * 1024)))

    num_part, den_part = pl.pallas_call(
        kernel,
        out_shape=(jax.ShapeDtypeStruct((nsplit, N, C), jnp.float32),
                   jax.ShapeDtypeStruct((nsplit, N, C), jnp.float32)),
        grid_spec=pltpu.PrefetchScalarGridSpec(
            num_scalar_prefetch=0,
            grid=(nsplit, inner_blocks),
            in_specs=[
                pl.BlockSpec((N, C, rows_per_block, _LANES), in_map),
                pl.BlockSpec((N, C, rows_per_block, _LANES), in_map),
            ],
            out_specs=[
                pl.BlockSpec((None, N, C), out_map),
                pl.BlockSpec((None, N, C), out_map),
            ],
            scratch_shapes=[
                pltpu.VMEM((N, C, acc_rows, _LANES), jnp.float32),
                pltpu.VMEM((N, C, acc_rows, _LANES), jnp.float32),
            ],
        ),
        compiler_params=pltpu.CompilerParams(
            dimension_semantics=dim_sems,
            vmem_limit_bytes=vmem_limit,
        ),
    )(a4, y4)

    # Tiny finishing math on (nsplit, N, C) partials in plain JAX.
    num = jnp.sum(num_part, axis=0) + smooth
    den = jnp.sum(den_part, axis=0) + smooth
    loss = 1.0 - num / den
    if gamma != 1:
        loss = loss ** gamma
    return jnp.mean(loss)


def region_loss_ref(alpha, y, *, alpha_coef=0.5, gamma=1, soft=False, smooth=1e-5):
    """Pure-JAX reference (direct transcription of the PyTorch forward)."""
    a, b = alpha_coef, 1.0 - alpha_coef
    S = alpha.sum(axis=1, keepdims=True)
    reduce_axes = tuple(range(2, y.ndim))
    numerator = (y * (alpha / S)).sum(axis=reduce_axes) + smooth
    if soft:
        den_a = (alpha / S) ** 2 + alpha * (S - alpha) / (S * S * (S + 1))
        den_b = y ** 2
    else:
        den_a = alpha / S
        den_b = y
    denominator = (a * den_a + b * den_b).sum(axis=reduce_axes) + smooth
    loss = 1.0 - numerator / denominator
    if gamma != 1:
        loss = loss ** gamma
    return loss.mean()


if __name__ == "__main__":
    key = jax.random.PRNGKey(0)
    k1, k2 = jax.random.split(key)
    N, C, H, W = 2, 4, 16, 16

    # Dirichlet concentration parameters (strictly positive), NCHW.
    alpha_in = jax.random.uniform(k1, (N, C, H, W), jnp.float32,
                                  minval=0.5, maxval=5.0)
    labels = jax.random.randint(k2, (N, H, W), 0, C)
    y_in = jnp.transpose(jax.nn.one_hot(labels, C, dtype=jnp.float32),
                         (0, 3, 1, 2))                               # NCHW

    out = jax.block_until_ready(
        region_loss(alpha_in, y_in, alpha_coef=0.5, gamma=1,
                    soft=False, smooth=1e-5))
    ref = region_loss_ref(alpha_in, y_in, alpha_coef=0.5, gamma=1,
                          soft=False, smooth=1e-5)
    assert jnp.allclose(out, ref, rtol=1e-5, atol=1e-5), (out, ref)

    # Second check: soft branch + gamma + non-128-multiple spatial size (mask
    # path) + y streamed as bfloat16 (one-hot values are exact in bf16).
    H2, W2 = 10, 10
    alpha2 = jax.random.uniform(k1, (N, C, H2, W2), jnp.float32,
                                minval=0.5, maxval=5.0)
    labels2 = jax.random.randint(k2, (N, H2, W2), 0, C)
    y2 = jnp.transpose(jax.nn.one_hot(labels2, C, dtype=jnp.float32),
                       (0, 3, 1, 2))
    out2 = jax.block_until_ready(
        region_loss(alpha2, y2.astype(jnp.bfloat16), alpha_coef=0.3, gamma=2,
                    soft=True, smooth=1e-5))
    ref2 = region_loss_ref(alpha2, y2, alpha_coef=0.3, gamma=2,
                           soft=True, smooth=1e-5)
    assert jnp.allclose(out2, ref2, rtol=1e-5, atol=1e-5), (out2, ref2)

    print("KERNEL_OK")
</pallas_src>

<mosaic_0001>
module attributes {stable_mosaic.version = 11 : i64} {
  func.func @_region_loss_kernel(%arg0: i32, %arg1: i32, %arg2: memref<2x4x2x128xf32, #tpu.memory_space<vmem>>, %arg3: memref<2x4x2x128xf32, #tpu.memory_space<vmem>>, %arg4: memref<1x2x4xf32, #tpu.memory_space<vmem>>, %arg5: memref<1x2x4xf32, #tpu.memory_space<vmem>>, %arg6: memref<2x4x2x128xf32, #tpu.memory_space<vmem>>, %arg7: memref<2x4x2x128xf32, #tpu.memory_space<vmem>>) attributes {dimension_semantics = [#tpu.dimension_semantics<arbitrary>, #tpu.dimension_semantics<arbitrary>], iteration_bounds = array<i64: 1, 1>, scalar_prefetch = 0 : i64, scratch_operands = 2 : i64, tpu.core_type = #tpu.core_type<tc>, window_params = [{transform_indices = @transform_0, window_bounds = array<i64: 2, 4, 2, 128>}, {transform_indices = @transform_1, window_bounds = array<i64: 2, 4, 2, 128>}, {transform_indices = @transform_2, window_bounds = array<i64: 1, 2, 4>}, {transform_indices = @transform_3, window_bounds = array<i64: 1, 2, 4>}]} {
    %c0_i32 = arith.constant 0 : i32
    %0 = arith.cmpi eq, %arg1, %c0_i32 : i32
    %1 = arith.extui %0 : i1 to i32
    %c0_i32_0 = arith.constant 0 : i32
    %2 = arith.cmpi ne, %1, %c0_i32_0 : i32
    scf.if %2 {
      %cst_29 = arith.constant 0.000000e+00 : f32
      %29 = vector.broadcast %cst_29 : f32 to vector<2x4x2x128xf32>
      %c0_30 = arith.constant 0 : index
      %c0_31 = arith.constant 0 : index
      %c0_32 = arith.constant 0 : index
      %c0_33 = arith.constant 0 : index
      %30 = vector.load %arg6[%c0_30, %c0_31, %c0_32, %c0_33] : memref<2x4x2x128xf32, #tpu.memory_space<vmem>>, vector<2x4x2x128xf32>
      tpu.vector_store %arg6[%c0_30, %c0_31, %c0_32, %c0_33], %29 {strides = array<i32>} : memref<2x4x2x128xf32, #tpu.memory_space<vmem>>, vector<2x4x2x128xf32>,
      %cst_34 = arith.constant 0.000000e+00 : f32
      %31 = vector.broadcast %cst_34 : f32 to vector<2x4x2x128xf32>
      %c0_35 = arith.constant 0 : index
      %c0_36 = arith.constant 0 : index
      %c0_37 = arith.constant 0 : index
      %c0_38 = arith.constant 0 : index
      %32 = vector.load %arg7[%c0_35, %c0_36, %c0_37, %c0_38] : memref<2x4x2x128xf32, #tpu.memory_space<vmem>>, vector<2x4x2x128xf32>
      tpu.vector_store %arg7[%c0_35, %c0_36, %c0_37, %c0_38], %31 {strides = array<i32>} : memref<2x4x2x128xf32, #tpu.memory_space<vmem>>, vector<2x4x2x128xf32>,
    } else {
    }
    %c0 = arith.constant 0 : index
    %c0_1 = arith.constant 0 : index
    %c0_2 = arith.constant 0 : index
    %c0_3 = arith.constant 0 : index
    %3 = vector.load %arg2[%c0, %c0_1, %c0_2, %c0_3] : memref<2x4x2x128xf32, #tpu.memory_space<vmem>>, vector<2x4x2x128xf32>
    %c0_4 = arith.constant 0 : index
    %c0_5 = arith.constant 0 : index
    %c0_6 = arith.constant 0 : index
    %c0_7 = arith.constant 0 : index
    %4 = vector.load %arg3[%c0_4, %c0_5, %c0_6, %c0_7] : memref<2x4x2x128xf32, #tpu.memory_space<vmem>>, vector<2x4x2x128xf32>
    %cst = arith.constant dense<0.000000e+00> : vector<2x2x128xf32>
    %5 = vector.multi_reduction <add>, %3, %cst [1] : vector<2x4x2x128xf32> to vector<2x2x128xf32>
    %6 = vector.shape_cast %5 : vector<2x2x128xf32> to vector<2x1x2x128xf32>
    %7 = tpu.reciprocal %6 {approx = true} : vector<2x1x2x128xf32> -> vector<2x1x2x128xf32>
    %8 = arith.mulf %6, %7 : vector<2x1x2x128xf32>
    %cst_8 = arith.constant 2.000000e+00 : f32
    %9 = vector.broadcast %cst_8 : f32 to vector<2x1x2x128xf32>
    %10 = arith.subf %9, %8 : vector<2x1x2x128xf32>
    %11 = arith.mulf %7, %10 : vector<2x1x2x128xf32>
    %12 = vector.broadcast %11 : vector<2x1x2x128xf32> to vector<2x4x2x128xf32>
    %13 = arith.mulf %3, %12 : vector<2x4x2x128xf32>
    %14 = arith.mulf %4, %13 : vector<2x4x2x128xf32>
    %cst_9 = arith.constant 5.000000e-01 : f32
    %15 = vector.broadcast %cst_9 : f32 to vector<2x4x2x128xf32>
    %16 = arith.mulf %15, %13 : vector<2x4x2x128xf32>
    %cst_10 = arith.constant 5.000000e-01 : f32
    %17 = vector.broadcast %cst_10 : f32 to vector<2x4x2x128xf32>
    %18 = arith.mulf %17, %4 : vector<2x4x2x128xf32>
    %19 = arith.addf %16, %18 : vector<2x4x2x128xf32>
    %c0_11 = arith.constant 0 : index
    %c0_12 = arith.constant 0 : index
    %c0_13 = arith.constant 0 : index
    %c0_14 = arith.constant 0 : index
    %20 = vector.load %arg6[%c0_11, %c0_12, %c0_13, %c0_14] : memref<2x4x2x128xf32, #tpu.memory_space<vmem>>, vector<2x4x2x128xf32>
    %21 = arith.addf %20, %14 : vector<2x4x2x128xf32>
    %c0_15 = arith.constant 0 : index
    %c0_16 = arith.constant 0 : index
    %c0_17 = arith.constant 0 : index
    %c0_18 = arith.constant 0 : index
    %22 = vector.load %arg6[%c0_15, %c0_16, %c0_17, %c0_18] : memref<2x4x2x128xf32, #tpu.memory_space<vmem>>, vector<2x4x2x128xf32>
    tpu.vector_store %arg6[%c0_15, %c0_16, %c0_17, %c0_18], %21 {strides = array<i32>} : memref<2x4x2x128xf32, #tpu.memory_space<vmem>>, vector<2x4x2x128xf32>,
    %c0_19 = arith.constant 0 : index
    %c0_20 = arith.constant 0 : index
    %c0_21 = arith.constant 0 : index
    %c0_22 = arith.constant 0 : index
    %23 = vector.load %arg7[%c0_19, %c0_20, %c0_21, %c0_22] : memref<2x4x2x128xf32, #tpu.memory_space<vmem>>, vector<2x4x2x128xf32>
    %24 = arith.addf %23, %19 : vector<2x4x2x128xf32>
    %c0_23 = arith.constant 0 : index
    %c0_24 = arith.constant 0 : index
    %c0_25 = arith.constant 0 : index
    %c0_26 = arith.constant 0 : index
    %25 = vector.load %arg7[%c0_23, %c0_24, %c0_25, %c0_26] : memref<2x4x2x128xf32, #tpu.memory_space<vmem>>, vector<2x4x2x128xf32>
    tpu.vector_store %arg7[%c0_23, %c0_24, %c0_25, %c0_26], %24 {strides = array<i32>} : memref<2x4x2x128xf32, #tpu.memory_space<vmem>>, vector<2x4x2x128xf32>,
    %c0_i32_27 = arith.constant 0 : i32
    %26 = arith.cmpi eq, %arg1, %c0_i32_27 : i32
    %27 = arith.extui %26 : i1 to i32
    %c0_i32_28 = arith.constant 0 : i32
    %28 = arith.cmpi ne, %27, %c0_i32_28 : i32
    scf.if %28 {
      %c0_29 = arith.constant 0 : index
      %c0_30 = arith.constant 0 : index
      %c0_31 = arith.constant 0 : index
      %c0_32 = arith.constant 0 : index
      %29 = vector.load %arg6[%c0_29, %c0_30, %c0_31, %c0_32] : memref<2x4x2x128xf32, #tpu.memory_space<vmem>>, vector<2x4x2x128xf32>
      %cst_33 = arith.constant dense<0.000000e+00> : vector<2x4x2xf32>
      %30 = vector.multi_reduction <add>, %29, %cst_33 [3] : vector<2x4x2x128xf32> to vector<2x4x2xf32>
      %cst_34 = arith.constant dense<0.000000e+00> : vector<2x4xf32>
      %31 = vector.multi_reduction <add>, %30, %cst_34 [2] : vector<2x4x2xf32> to vector<2x4xf32>
      %c0_35 = arith.constant 0 : index
      %c0_36 = arith.constant 0 : index
      %c0_37 = arith.constant 0 : index
      %32 = vector.load %arg4[%c0_35, %c0_36, %c0_37] : memref<1x2x4xf32, #tpu.memory_space<vmem>>, vector<1x2x4xf32>
      %33 = vector.shape_cast %32 : vector<1x2x4xf32> to vector<2x4xf32>
      %34 = vector.shape_cast %31 : vector<2x4xf32> to vector<1x2x4xf32>
      tpu.vector_store %arg4[%c0_35, %c0_36, %c0_37], %34 {strides = array<i32>} : memref<1x2x4xf32, #tpu.memory_space<vmem>>, vector<1x2x4xf32>,
      %c0_38 = arith.constant 0 : index
      %c0_39 = arith.constant 0 : index
      %c0_40 = arith.constant 0 : index
      %c0_41 = arith.constant 0 : index
      %35 = vector.load %arg7[%c0_38, %c0_39, %c0_40, %c0_41] : memref<2x4x2x128xf32, #tpu.memory_space<vmem>>, vector<2x4x2x128xf32>
      %cst_42 = arith.constant dense<0.000000e+00> : vector<2x4x2xf32>
      %36 = vector.multi_reduction <add>, %35, %cst_42 [3] : vector<2x4x2x128xf32> to vector<2x4x2xf32>
      %cst_43 = arith.constant dense<0.000000e+00> : vector<2x4xf32>
      %37 = vector.multi_reduction <add>, %36, %cst_43 [2] : vector<2x4x2xf32> to vector<2x4xf32>
      %c0_44 = arith.constant 0 : index
      %c0_45 = arith.constant 0 : index
      %c0_46 = arith.constant 0 : index
      %38 = vector.load %arg5[%c0_44, %c0_45, %c0_46] : memref<1x2x4xf32, #tpu.memory_space<vmem>>, vector<1x2x4xf32>
      %39 = vector.shape_cast %38 : vector<1x2x4xf32> to vector<2x4xf32>
      %40 = vector.shape_cast %37 : vector<2x4xf32> to vector<1x2x4xf32>
      tpu.vector_store %arg5[%c0_44, %c0_45, %c0_46], %40 {strides = array<i32>} : memref<1x2x4xf32, #tpu.memory_space<vmem>>, vector<1x2x4xf32>,
    } else {
    }
    return
  }
  func.func @transform_0(%arg0: i32, %arg1: i32) -> (i32, i32, i32, i32) {
    %c1_i32 = arith.constant 1 : i32
    %0 = arith.muli %arg0, %c1_i32 : i32
    %1 = arith.addi %0, %arg1 : i32
    %c0_i32 = arith.constant 0 : i32
    %c0_i32_0 = arith.constant 0 : i32
    %c0_i32_1 = arith.constant 0 : i32
    %c0_i32_2 = arith.constant 0 : i32
    return %c0_i32, %c0_i32_0, %1, %c0_i32_1 : i32, i32, i32, i32
  }
  func.func @transform_1(%arg0: i32, %arg1: i32) -> (i32, i32, i32, i32) {
    %c1_i32 = arith.constant 1 : i32
    %0 = arith.muli %arg0, %c1_i32 : i32
    %1 = arith.addi %0, %arg1 : i32
    %c0_i32 = arith.constant 0 : i32
    %c0_i32_0 = arith.constant 0 : i32
    %c0_i32_1 = arith.constant 0 : i32
    %c0_i32_2 = arith.constant 0 : i32
    return %c0_i32, %c0_i32_0, %1, %c0_i32_1 : i32, i32, i32, i32
  }
  func.func @transform_2(%arg0: i32, %arg1: i32) -> (i32, i32, i32) {
    %c0_i32 = arith.constant 0 : i32
    %c0_i32_0 = arith.constant 0 : i32
    %c0_i32_1 = arith.constant 0 : i32
    return %arg0, %c0_i32, %c0_i32_0 : i32, i32, i32
  }
  func.func @transform_3(%arg0: i32, %arg1: i32) -> (i32, i32, i32) {
    %c0_i32 = arith.constant 0 : i32
    %c0_i32_0 = arith.constant 0 : i32
    %c0_i32_1 = arith.constant 0 : i32
    return %arg0, %c0_i32, %c0_i32_0 : i32, i32, i32
  }
}

</mosaic_0001>

<llo_original>
// kernel: tpu_custom_call.1
$region0: #{tpu_custom_call.1}
  #allocation0 [shape = 'u32[]', space=smem, size = 0x4, offset = 0x4, fixed_abs, tag = 'smem constant byte address 0x4 - core index']
  #allocation1 [shape = 'u32[144,128]{1,0:T(1,128)}', space=vmem, size = 0x12000, scoped, tag = 'internal scratch']
  #allocation2 [shape = 'f32[2,4,2,128]{3,2,1,0:T(2,128)}', space=vmem, size = 0x2000, scoped, tag = 'scratch operand']
  #allocation3 [shape = 'f32[2,4,2,128]{3,2,1,0:T(2,128)}', space=vmem, size = 0x2000, scoped, tag = 'scratch operand']
  %s0 = inlined_call_operand.hbm [shape: f32[2,4,2,128], index: 0, kind: input, shape index: {}]
  %s1 = inlined_call_operand.hbm [shape: f32[2,4,2,128], index: 1, kind: input, shape index: {}]
  %s2 = inlined_call_operand.hbm [shape: f32[1,2,4], index: 2, kind: output, shape index: {0}]
  %s3 = inlined_call_operand.hbm [shape: f32[1,2,4], index: 3, kind: output, shape index: {1}]
  %4 = xla_tuple %s2, %s3
  %s5 = sld [smem:[#allocation0]]
  $region42: #{tpu_custom_call.1} parent=0
    _
  %s7 = ssub.s32 1, %s5
  %s8 = scalar_select 0, %s7, %s5
  $region1: #{tpu_custom_call.1} parent=0
    #allocation4 [shape = 'u8[8192]{0}', space=vmem, size = 0x2000, scoped, tag = 'input window, operand 0, single buffered']
    #allocation5 [shape = 's32[1]{0}', space=sflag, size = 0x4, scoped, tag = 'scoped memory for tpu_custom_call.1']
    #allocation6 [shape = 's32[1]{0}', space=sflag, size = 0x4, scoped, tag = 'scoped memory for tpu_custom_call.1']
    #allocation7 [shape = 'u8[8192]{0}', space=vmem, size = 0x2000, scoped, tag = 'input window, operand 1, single buffered']
    #allocation8 [shape = 's32[1]{0}', space=sflag, size = 0x4, scoped, tag = 'scoped memory for tpu_custom_call.1']
    #allocation9 [shape = 'u8[1024]{0}', space=vmem, size = 0x400, scoped, tag = 'output window, operand 0, single buffered']
    #allocation10 [shape = 'u8[1024]{0}', space=vmem, size = 0x400, scoped, tag = 'output window, operand 1, single buffered']
    #allocation11 [shape = 's32[1]{0}', space=sflag, size = 0x4, scoped, tag = 'scoped memory for tpu_custom_call.1']
    %9 = vsyncpa [#allocation5], 0
    %10 = vsyncpa [#allocation8], 0
    %11 = vsyncpa [#allocation6], 0
    %12 = vsyncpa [#allocation11], 0
    // Predicated region
    $region2: #{tpu_custom_call.1} parent=1 // pred_check
      _
    $region3: #{tpu_custom_call.1} parent=1 // pred_check_branch
      %14 = sbr.rel (0) target = $region5
    $region4: #{tpu_custom_call.1} parent=1 // pred_region
      %s15 = sadd.s32 0, 0
      %s17 = ssub.s32 256, 256
      %18 = vsyncadd [#allocation5], %s17
      %s19 = smul.addr %s15, 32
      %s20 = scalar_lea.hbm %s0, %s19
      %s21 = sshll.u32 [#allocation4], 4
      %s22 = int_to_ptr.vmem [resolvable:$true] %s21
      %27 = dma.hbm_to_vmem [thread:$0]  %s20, 256, %s22, [#allocation5], 32, 32, 2
    $region5: #{tpu_custom_call.1} parent=1 // pred_fallthru
      _
    // Predicated region
    $region6: #{tpu_custom_call.1} parent=1 // pred_check
      _
    $region7: #{tpu_custom_call.1} parent=1 // pred_check_branch
      %29 = sbr.rel (0) target = $region9
    $region8: #{tpu_custom_call.1} parent=1 // pred_region
      %s30 = sadd.s32 0, 0
      %s32 = ssub.s32 256, 256
      %33 = vsyncadd [#allocation8], %s32
      %s34 = smul.addr %s30, 32
      %s35 = scalar_lea.hbm %s1, %s34
      %s36 = sshll.u32 [#allocation7], 4
      %s37 = int_to_ptr.vmem [resolvable:$true] %s36
      %42 = dma.hbm_to_vmem [thread:$0]  %s35, 256, %s37, [#allocation8], 32, 32, 2
    $region9: #{tpu_custom_call.1} parent=1 // pred_fallthru
      _
    // Predicated region
    $region10: #{tpu_custom_call.1} parent=1 // pred_check
      _
    $region11: #{tpu_custom_call.1} parent=1 // pred_check_branch
      %44 = sbr.rel (0) target = $region13
    $region12: #{tpu_custom_call.1} parent=1 // pred_region
      %45 = dma.done [#allocation5], 256
    $region13: #{tpu_custom_call.1} parent=1 // pred_fallthru
      _
    // Predicated region
    $region14: #{tpu_custom_call.1} parent=1 // pred_check
      _
    $region15: #{tpu_custom_call.1} parent=1 // pred_check_branch
      %47 = sbr.rel (0) target = $region17
    $region16: #{tpu_custom_call.1} parent=1 // pred_region
      %48 = dma.done [#allocation8], 256
    $region17: #{tpu_custom_call.1} parent=1 // pred_fallthru
      _
    %s49 = sadd.s32 0, 0
    %s50 = sadd.s32 0, 0
    %p51 = scmp.eq.s32.totalorder 0, 0
    // Predicated region
    $region18: #{tpu_custom_call.1} parent=1 // pred_check
      %p52 = pneg %p51
    $region19: #{tpu_custom_call.1} parent=1 // pred_check_branch
      %54 = sbr.rel (%p52) target = $region21
    $region20: #{tpu_custom_call.1} parent=1 // pred_region
      %55 = vst [vmem:[#allocation2] sm:$0x3] 0.0
      %56 = vst [vmem:[#allocation2 + $0x2] sm:$0x3] 0.0
      %57 = vst [vmem:[#allocation2 + $0x4] sm:$0x3] 0.0
      %58 = vst [vmem:[#allocation2 + $0x6] sm:$0x3] 0.0
      %59 = vst [vmem:[#allocation2 + $0x8] sm:$0x3] 0.0
      %60 = vst [vmem:[#allocation2 + $0xa] sm:$0x3] 0.0
      %61 = vst [vmem:[#allocation2 + $0xc] sm:$0x3] 0.0
      %62 = vst [vmem:[#allocation2 + $0xe] sm:$0x3] 0.0
      %63 = vst [vmem:[#allocation3] sm:$0x3] 0.0
      %64 = vst [vmem:[#allocation3 + $0x2] sm:$0x3] 0.0
      %65 = vst [vmem:[#allocation3 + $0x4] sm:$0x3] 0.0
      %66 = vst [vmem:[#allocation3 + $0x6] sm:$0x3] 0.0
      %67 = vst [vmem:[#allocation3 + $0x8] sm:$0x3] 0.0
      %68 = vst [vmem:[#allocation3 + $0xa] sm:$0x3] 0.0
      %69 = vst [vmem:[#allocation3 + $0xc] sm:$0x3] 0.0
      %70 = vst [vmem:[#allocation3 + $0xe] sm:$0x3] 0.0
    $region21: #{tpu_custom_call.1} parent=1 // pred_fallthru
      _
    %v71 = vld [vmem:[#allocation4] sm:$0x3]
    %v72 = vld [vmem:[#allocation4 + $0x2] sm:$0x3]
    %v73 = vld [vmem:[#allocation4 + $0x4] sm:$0x3]
    %v74 = vld [vmem:[#allocation4 + $0x6] sm:$0x3]
    %v75 = vld [vmem:[#allocation4 + $0x8] sm:$0x3]
    %v76 = vld [vmem:[#allocation4 + $0xa] sm:$0x3]
    %v77 = vld [vmem:[#allocation4 + $0xc] sm:$0x3]
    %v78 = vld [vmem:[#allocation4 + $0xe] sm:$0x3]
    %v79 = vld [vmem:[#allocation7] sm:$0x3]
    %v80 = vld [vmem:[#allocation7 + $0x2] sm:$0x3]
    %v81 = vld [vmem:[#allocation7 + $0x4] sm:$0x3]
    %v82 = vld [vmem:[#allocation7 + $0x6] sm:$0x3]
    %v83 = vld [vmem:[#allocation7 + $0x8] sm:$0x3]
    %v84 = vld [vmem:[#allocation7 + $0xa] sm:$0x3]
    %v85 = vld [vmem:[#allocation7 + $0xc] sm:$0x3]
    %v86 = vld [vmem:[#allocation7 + $0xe] sm:$0x3]
    %vm87 = vcmask 1041408
    %v88 = vsel %vm87, %v71, 0.0
    %v89 = vsel %vm87, %v72, 0.0
    %v90 = vadd.f32 %v88, %v89
    %v91 = vsel %vm87, %v73, 0.0
    %v92 = vadd.f32 %v90, %v91
    %v93 = vsel %vm87, %v74, 0.0
    %v94 = vadd.f32 %v92, %v93
    %v95 = vsel %vm87, %v75, 0.0
    %v96 = vsel %vm87, %v76, 0.0
    %v97 = vadd.f32 %v95, %v96
    %v98 = vsel %vm87, %v77, 0.0
    %v99 = vadd.f32 %v97, %v98
    %v100 = vsel %vm87, %v78, 0.0
    %v101 = vadd.f32 %v99, %v100
    %v102 = vrcp.pop %v94
    %v103 = vrcp.pop %v101
    %v104 = vmul.f32 %v94, %v102
    %v105 = vmul.f32 %v101, %v103
    %v106 = vsub.f32 2.0, %v104
    %v107 = vsub.f32 2.0, %v105
    %v108 = vmul.f32 %v102, %v106
    %v109 = vmul.f32 %v103, %v107
    %v110 = vmul.f32 %v71, %v108
    %v111 = vmul.f32 %v72, %v108
    %v112 = vmul.f32 %v73, %v108
    %v113 = vmul.f32 %v74, %v108
    %v114 = vmul.f32 %v75, %v109
    %v115 = vmul.f32 %v76, %v109
    %v116 = vmul.f32 %v77, %v109
    %v117 = vmul.f32 %v78, %v109
    %v118 = vmul.f32 %v79, %v110
    %v119 = vmul.f32 %v80, %v111
    %v120 = vmul.f32 %v81, %v112
    %v121 = vmul.f32 %v82, %v113
    %v122 = vmul.f32 %v83, %v114
    %v123 = vmul.f32 %v84, %v115
    %v124 = vmul.f32 %v85, %v116
    %v125 = vmul.f32 %v86, %v117
    %v126 = vmul.f32 %v110, 0.5
    %v127 = vmul.f32 %v111, 0.5
    %v128 = vmul.f32 %v112, 0.5
    %v129 = vmul.f32 %v113, 0.5
    %v130 = vmul.f32 %v114, 0.5
    %v131 = vmul.f32 %v115, 0.5
    %v132 = vmul.f32 %v116, 0.5
    %v133 = vmul.f32 %v117, 0.5
    %v134 = vmul.f32 %v79, 0.5
    %v135 = vmul.f32 %v80, 0.5
    %v136 = vmul.f32 %v81, 0.5
    %v137 = vmul.f32 %v82, 0.5
    %v138 = vmul.f32 %v83, 0.5
    %v139 = vmul.f32 %v84, 0.5
    %v140 = vmul.f32 %v85, 0.5
    %v141 = vmul.f32 %v86, 0.5
    %v142 = vadd.f32 %v126, %v134
    %v143 = vadd.f32 %v127, %v135
    %v144 = vadd.f32 %v128, %v136
    %v145 = vadd.f32 %v129, %v137
    %v146 = vadd.f32 %v130, %v138
    %v147 = vadd.f32 %v131, %v139
    %v148 = vadd.f32 %v132, %v140
    %v149 = vadd.f32 %v133, %v141
    %v150 = vld [vmem:[#allocation2] sm:$0x3]
    %v151 = vld [vmem:[#allocation2 + $0x2] sm:$0x3]
    %v152 = vld [vmem:[#allocation2 + $0x4] sm:$0x3]
    %v153 = vld [vmem:[#allocation2 + $0x6] sm:$0x3]
    %v154 = vld [vmem:[#allocation2 + $0x8] sm:$0x3]
    %v155 = vld [vmem:[#allocation2 + $0xa] sm:$0x3]
    %v156 = vld [vmem:[#allocation2 + $0xc] sm:$0x3]
    %v157 = vld [vmem:[#allocation2 + $0xe] sm:$0x3]
    %v158 = vadd.f32 %v150, %v118
    %v159 = vadd.f32 %v151, %v119
    %v160 = vadd.f32 %v152, %v120
    %v161 = vadd.f32 %v153, %v121
    %v162 = vadd.f32 %v154, %v122
    %v163 = vadd.f32 %v155, %v123
    %v164 = vadd.f32 %v156, %v124
    %v165 = vadd.f32 %v157, %v125
    %166 = vst [vmem:[#allocation2] sm:$0x3] %v158
    %167 = vst [vmem:[#allocation2 + $0x2] sm:$0x3] %v159
    %168 = vst [vmem:[#allocation2 + $0x4] sm:$0x3] %v160
    %169 = vst [vmem:[#allocation2 + $0x6] sm:$0x3] %v161
    %170 = vst [vmem:[#allocation2 + $0x8] sm:$0x3] %v162
    %171 = vst [vmem:[#allocation2 + $0xa] sm:$0x3] %v163
    %172 = vst [vmem:[#allocation2 + $0xc] sm:$0x3] %v164
    %173 = vst [vmem:[#allocation2 + $0xe] sm:$0x3] %v165
    %v174 = vld [vmem:[#allocation3] sm:$0x3]
    %v175 = vld [vmem:[#allocation3 + $0x2] sm:$0x3]
    %v176 = vld [vmem:[#allocation3 + $0x4] sm:$0x3]
    %v177 = vld [vmem:[#allocation3 + $0x6] sm:$0x3]
    %v178 = vld [vmem:[#allocation3 + $0x8] sm:$0x3]
    %v179 = vld [vmem:[#allocation3 + $0xa] sm:$0x3]
    %v180 = vld [vmem:[#allocation3 + $0xc] sm:$0x3]
    %v181 = vld [vmem:[#allocation3 + $0xe] sm:$0x3]
    %v182 = vadd.f32 %v174, %v142
    %v183 = vadd.f32 %v175, %v143
    %v184 = vadd.f32 %v176, %v144
    %v185 = vadd.f32 %v177, %v145
    %v186 = vadd.f32 %v178, %v146
    %v187 = vadd.f32 %v179, %v147
    %v188 = vadd.f32 %v180, %v148
    %v189 = vadd.f32 %v181, %v149
    %190 = vst [vmem:[#allocation3] sm:$0x3] %v182
    %191 = vst [vmem:[#allocation3 + $0x2] sm:$0x3] %v183
    %192 = vst [vmem:[#allocation3 + $0x4] sm:$0x3] %v184
    %193 = vst [vmem:[#allocation3 + $0x6] sm:$0x3] %v185
    %194 = vst [vmem:[#allocation3 + $0x8] sm:$0x3] %v186
    %195 = vst [vmem:[#allocation3 + $0xa] sm:$0x3] %v187
    %196 = vst [vmem:[#allocation3 + $0xc] sm:$0x3] %v188
    %197 = vst [vmem:[#allocation3 + $0xe] sm:$0x3] %v189
    // Predicated region
    $region22: #{tpu_custom_call.1} parent=1 // pred_check
      %p198 = pneg %p51
    $region23: #{tpu_custom_call.1} parent=1 // pred_check_branch
      %200 = sbr.rel (%p198) target = $region25
    $region24: #{tpu_custom_call.1} parent=1 // pred_region
      %v201 = vld [vmem:[#allocation2] sm:$0x3]
      %v202 = vld [vmem:[#allocation2 + $0x2] sm:$0x3]
      %v203 = vld [vmem:[#allocation2 + $0x4] sm:$0x3]
      %v204 = vld [vmem:[#allocation2 + $0x6] sm:$0x3]
      %v205 = vld [vmem:[#allocation2 + $0x8] sm:$0x3]
      %v206 = vld [vmem:[#allocation2 + $0xa] sm:$0x3]
      %v207 = vld [vmem:[#allocation2 + $0xc] sm:$0x3]
      %v208 = vld [vmem:[#allocation2 + $0xe] sm:$0x3]
      %v209 = vsel %vm87, %v201, 0.0
      %210 = vadd.xlane.f32.xlu0 %v209
      %v211 = vpop.xlane.xlu0 %210
      %v212 = vsel %vm87, %v202, 0.0
      %213 = vadd.xlane.f32.xlu0 %v212
      %v214 = vpop.xlane.xlu0 %213
      %v215 = vsel %vm87, %v203, 0.0
      %216 = vadd.xlane.f32.xlu0 %v215
      %v217 = vpop.xlane.xlu0 %216
      %v218 = vsel %vm87, %v204, 0.0
      %219 = vadd.xlane.f32.xlu0 %v218
      %v220 = vpop.xlane.xlu0 %219
      %v221 = vsel %vm87, %v205, 0.0
      %222 = vadd.xlane.f32.xlu0 %v221
      %v223 = vpop.xlane.xlu0 %222
      %v224 = vsel %vm87, %v206, 0.0
      %225 = vadd.xlane.f32.xlu0 %v224
      %v226 = vpop.xlane.xlu0 %225
      %v227 = vsel %vm87, %v207, 0.0
      %228 = vadd.xlane.f32.xlu0 %v227
      %v229 = vpop.xlane.xlu0 %228
      %v230 = vsel %vm87, %v208, 0.0
      %231 = vadd.xlane.f32.xlu0 %v230
      %v232 = vpop.xlane.xlu0 %231
      %v241 = vlaneseq
      %v242 = vand.u32 %v241, 127
      %v243 = vlaneseq
      %v244 = vshrl.u32 %v243, 7
      %v245 = vsub.s32 %v242, %v244
      %v246 = vrot.slane %v211, %v245
      %v247 = vlaneseq
      %v248 = vshrl.u32 %v247, 7
      %v249 = vsub.s32 %v242, %v248
      %v250 = vrot.slane %v214, %v249
      %v251 = vlaneseq
      %v252 = vshrl.u32 %v251, 7
      %v253 = vsub.s32 %v242, %v252
      %v254 = vrot.slane %v217, %v253
      %v255 = vlaneseq
      %v256 = vshrl.u32 %v255, 7
      %v257 = vsub.s32 %v242, %v256
      %v258 = vrot.slane %v220, %v257
      %v259 = vlaneseq
      %v260 = vshrl.u32 %v259, 7
      %v261 = vsub.s32 %v242, %v260
      %v262 = vrot.slane %v223, %v261
      %v263 = vlaneseq
      %v264 = vshrl.u32 %v263, 7
      %v265 = vsub.s32 %v242, %v264
      %v266 = vrot.slane %v226, %v265
      %v267 = vlaneseq
      %v268 = vshrl.u32 %v267, 7
      %v269 = vsub.s32 %v242, %v268
      %v270 = vrot.slane %v229, %v269
      %v271 = vlaneseq
      %v272 = vshrl.u32 %v271, 7
      %v273 = vsub.s32 %v242, %v272
      %v274 = vrot.slane %v232, %v273
      %vm275 = vcmask 1041409
      %v276 = vsel %vm275, %v250, %v246
      %vm277 = vcmask 1042434
      %v278 = vsel %vm277, %v254, %v276
      %vm279 = vcmask 1043459
      %v280 = vsel %vm279, %v258, %v278
      %v281 = vsel %vm275, %v266, %v262
      %v282 = vsel %vm277, %v270, %v281
      %v283 = vsel %vm279, %v274, %v282
      %vm286 = vcmask 11264
      %v287 = vsel %vm286, %v280, 0.0
      %288 = vadd.xlane.f32.xlu0 %v287
      %v289 = vpop.xlane.xlu0 %288
      %v290 = vsel %vm286, %v283, 0.0
      %291 = vadd.xlane.f32.xlu0 %v290
      %v292 = vpop.xlane.xlu0 %291
      %v295 = vlaneseq
      %v296 = vshrl.u32 %v295, 7
      %v297 = vsub.s32 %v242, %v296
      %v298 = vrot.slane %v289, %v297
      %v299 = vlaneseq
      %v300 = vshrl.u32 %v299, 7
      %v301 = vsub.s32 %v242, %v300
      %v302 = vrot.slane %v292, %v301
      %v303 = vsel %vm275, %v302, %v298
      %vm305 = vcmask 25600
      %306 = vst.msk [vmem:[#allocation9] sm:$0x3] %vm305, %v303
      %v307 = vld [vmem:[#allocation3] sm:$0x3]
      %v308 = vld [vmem:[#allocation3 + $0x2] sm:$0x3]
      %v309 = vld [vmem:[#allocation3 + $0x4] sm:$0x3]
      %v310 = vld [vmem:[#allocation3 + $0x6] sm:$0x3]
      %v311 = vld [vmem:[#allocation3 + $0x8] sm:$0x3]
      %v312 = vld [vmem:[#allocation3 + $0xa] sm:$0x3]
      %v313 = vld [vmem:[#allocation3 + $0xc] sm:$0x3]
      %v314 = vld [vmem:[#allocation3 + $0xe] sm:$0x3]
      %v315 = vsel %vm87, %v307, 0.0
      %316 = vadd.xlane.f32.xlu0 %v315
      %v317 = vpop.xlane.xlu0 %316
      %v318 = vsel %vm87, %v308, 0.0
      %319 = vadd.xlane.f32.xlu0 %v318
      %v320 = vpop.xlane.xlu0 %319
      %v321 = vsel %vm87, %v309, 0.0
      %322 = vadd.xlane.f32.xlu0 %v321
      %v323 = vpop.xlane.xlu0 %322
      %v324 = vsel %vm87, %v310, 0.0
      %325 = vadd.xlane.f32.xlu0 %v324
      %v326 = vpop.xlane.xlu0 %325
      %v327 = vsel %vm87, %v311, 0.0
      %328 = vadd.xlane.f32.xlu0 %v327
      %v329 = vpop.xlane.xlu0 %328
      %v330 = vsel %vm87, %v312, 0.0
      %331 = vadd.xlane.f32.xlu0 %v330
      %v332 = vpop.xlane.xlu0 %331
      %v333 = vsel %vm87, %v313, 0.0
      %334 = vadd.xlane.f32.xlu0 %v333
      %v335 = vpop.xlane.xlu0 %334
      %v336 = vsel %vm87, %v314, 0.0
      %337 = vadd.xlane.f32.xlu0 %v336
      %v338 = vpop.xlane.xlu0 %337
      %v347 = vlaneseq
      %v348 = vshrl.u32 %v347, 7
      %v349 = vsub.s32 %v242, %v348
      %v350 = vrot.slane %v317, %v349
      %v351 = vlaneseq
      %v352 = vshrl.u32 %v351, 7
      %v353 = vsub.s32 %v242, %v352
      %v354 = vrot.slane %v320, %v353
      %v355 = vlaneseq
      %v356 = vshrl.u32 %v355, 7
      %v357 = vsub.s32 %v242, %v356
      %v358 = vrot.slane %v323, %v357
      %v359 = vlaneseq
      %v360 = vshrl.u32 %v359, 7
      %v361 = vsub.s32 %v242, %v360
      %v362 = vrot.slane %v326, %v361
      %v363 = vlaneseq
      %v364 = vshrl.u32 %v363, 7
      %v365 = vsub.s32 %v242, %v364
      %v366 = vrot.slane %v329, %v365
      %v367 = vlaneseq
      %v368 = vshrl.u32 %v367, 7
      %v369 = vsub.s32 %v242, %v368
      %v370 = vrot.slane %v332, %v369
      %v371 = vlaneseq
      %v372 = vshrl.u32 %v371, 7
      %v373 = vsub.s32 %v242, %v372
      %v374 = vrot.slane %v335, %v373
      %v375 = vlaneseq
      %v376 = vshrl.u32 %v375, 7
      %v377 = vsub.s32 %v242, %v376
      %v378 = vrot.slane %v338, %v377
      %v379 = vsel %vm275, %v354, %v350
      %v380 = vsel %vm277, %v358, %v379
      %v381 = vsel %vm279, %v362, %v380
      %v382 = vsel %vm275, %v370, %v366
      %v383 = vsel %vm277, %v374, %v382
      %v384 = vsel %vm279, %v378, %v383
      %v387 = vsel %vm286, %v381, 0.0
      %388 = vadd.xlane.f32.xlu0 %v387
      %v389 = vpop.xlane.xlu0 %388
      %v390 = vsel %vm286, %v384, 0.0
      %391 = vadd.xlane.f32.xlu0 %v390
      %v392 = vpop.xlane.xlu0 %391
      %v395 = vlaneseq
      %v396 = vshrl.u32 %v395, 7
      %v397 = vsub.s32 %v242, %v396
      %v398 = vrot.slane %v389, %v397
      %v399 = vlaneseq
      %v400 = vshrl.u32 %v399, 7
      %v401 = vsub.s32 %v242, %v400
      %v402 = vrot.slane %v392, %v401
      %v403 = vsel %vm275, %v402, %v398
      %405 = vst.msk [vmem:[#allocation10] sm:$0x3] %vm305, %v403
    $region25: #{tpu_custom_call.1} parent=1 // pred_fallthru
      _
    // Predicated region
    $region26: #{tpu_custom_call.1} parent=1 // pred_check
      _
    $region27: #{tpu_custom_call.1} parent=1 // pred_check_branch
      %407 = sbr.rel (0) target = $region29
    $region28: #{tpu_custom_call.1} parent=1 // pred_region
      %s409 = ssub.s32 32, 32
      %410 = vsyncadd [#allocation6], %s409
      %s412 = sshll.u32 [#allocation9], 4
      %s413 = int_to_ptr.vmem [resolvable:$true] %s412
      %415 = dma.vmem_to_hbm [thread:$0]  %s413, 32, %s2, [#allocation6]
    $region29: #{tpu_custom_call.1} parent=1 // pred_fallthru
      _
    // Predicated region
    $region30: #{tpu_custom_call.1} parent=1 // pred_check
      _
    $region31: #{tpu_custom_call.1} parent=1 // pred_check_branch
      %417 = sbr.rel (0) target = $region33
    $region32: #{tpu_custom_call.1} parent=1 // pred_region
      %s419 = ssub.s32 32, 32
      %420 = vsyncadd [#allocation11], %s419
      %s422 = sshll.u32 [#allocation10], 4
      %s423 = int_to_ptr.vmem [resolvable:$true] %s422
      %425 = dma.vmem_to_hbm [thread:$0]  %s423, 32, %s3, [#allocation11]
    $region33: #{tpu_custom_call.1} parent=1 // pred_fallthru
      _
    // Predicated region
    $region34: #{tpu_custom_call.1} parent=1 // pred_check
      _
    $region35: #{tpu_custom_call.1} parent=1 // pred_check_branch
      %427 = sbr.rel (0) target = $region37
    $region36: #{tpu_custom_call.1} parent=1 // pred_region
      %428 = dma.done [#allocation6], 32
    $region37: #{tpu_custom_call.1} parent=1 // pred_fallthru
      _
    // Predicated region
    $region38: #{tpu_custom_call.1} parent=1 // pred_check
      _
    $region39: #{tpu_custom_call.1} parent=1 // pred_check_branch
      %430 = sbr.rel (0) target = $region41
    $region40: #{tpu_custom_call.1} parent=1 // pred_region
      %431 = dma.done [#allocation11], 32
    $region41: #{tpu_custom_call.1} parent=1 // pred_fallthru
      _
    %432 = vsyncpa [#allocation5], 1
    %433 = vsyncpa [#allocation8], 1
    %434 = vsyncpa [#allocation6], 1
    %435 = vsyncpa [#allocation11], 1

</llo_original>
